<compile_context>
chip_gen: v6e
topology: v6e:2x2x1
jax: 0.10.0
libtpu: 0.0.40
codegen_flags: <defaults>
</compile_context>

<pallas_src>
import jax
import jax.numpy as jnp
from jax.experimental import pallas as pl
from jax.experimental.pallas import tpu as pltpu

_LANE = 128
_MAX_LANE_WIDTH = 2048                 # lane-dense last dim (multiple of 128)
_CHUNK_TARGET_BYTES = 4 * 1024 * 1024  # ~4 MiB per in-flight DMA chunk
_MIN_SPLIT_BYTES = 2 * 1024 * 1024     # below this, a single DMA is enough
_MAX_CHUNKS = 8                        # cap on concurrently in-flight chunks


def _make_dma_copy_kernel(chunks):
    """Build a grid-less kernel that copies `chunks` (static (start, size) pairs
    along the leading axis) from the input HBM ref to the output HBM ref."""

    def kernel(x_ref, o_ref, sems):
        copies = []
        # Start every chunk's HBM->HBM DMA before waiting on any of them so the
        # copies overlap across DMA queues.
        for c, (start, size) in enumerate(chunks):
            cp = pltpu.make_async_copy(
                x_ref.at[pl.ds(start, size)],
                o_ref.at[pl.ds(start, size)],
                sems.at[c],
            )
            cp.start()
            copies.append(cp)
        for cp in copies:
            cp.wait()

    return kernel


def _pallas_identity_copy(x: jax.Array) -> jax.Array:
    """Identity implemented as a direct HBM->HBM DMA copy (no VMEM staging)."""
    orig_shape = x.shape
    total = x.size
    if total == 0:
        return x  # nothing to move

    itemsize = jnp.dtype(x.dtype).itemsize
    total_bytes = total * itemsize

    # Flatten.  If the element count divides by 128 we use a lane-dense 2-D
    # shape (rows, cols) for tidy chunking; otherwise a plain 1-D flatten is
    # fine — the DMA is a raw contiguous copy, so no lane masking is involved.
    if total % _LANE == 0:
        cols = _LANE
        while cols * 2 <= _MAX_LANE_WIDTH and total % (cols * 2) == 0:
            cols *= 2
        rows = total // cols
        flat_shape = (rows, cols)
    else:
        rows = total
        flat_shape = (total,)
    x_flat = x.reshape(flat_shape)

    # Chunk the leading axis so multiple DMAs are in flight for larger copies.
    if total_bytes >= _MIN_SPLIT_BYTES:
        n_chunks = min(_MAX_CHUNKS,
                       max(2, pl.cdiv(total_bytes, _CHUNK_TARGET_BYTES)))
    else:
        n_chunks = 1
    n_chunks = max(1, min(n_chunks, rows))
    chunk_rows = pl.cdiv(rows, n_chunks)

    chunks = []
    start = 0
    while start < rows:
        size = min(chunk_rows, rows - start)
        chunks.append((start, size))
        start += size

    out = pl.pallas_call(
        _make_dma_copy_kernel(chunks),
        out_shape=jax.ShapeDtypeStruct(flat_shape, x.dtype),
        in_specs=[pl.BlockSpec(memory_space=pl.ANY)],    # raw HBM ref (no auto-DMA)
        out_specs=pl.BlockSpec(memory_space=pl.ANY),     # raw HBM ref (no auto-DMA)
        scratch_shapes=[pltpu.SemaphoreType.DMA((len(chunks),))],
    )(x_flat)

    return out.reshape(orig_shape)


def linear_act(x: jax.Array, *, force_kernel: bool = False) -> jax.Array:
    """Pallas implementation of LinearAct.forward (identity).

    By default this short-circuits and returns `x` untouched — zero HBM
    traffic, the optimal lowering of an identity op.  `force_kernel=True`
    materializes a copy via the HBM->HBM DMA Pallas kernel above.
    """
    if not force_kernel:
        return x
    return _pallas_identity_copy(x)


if __name__ == "__main__":
    key = jax.random.PRNGKey(0)

    # NCHW input consistent with typical conv-net usage of LinearAct.
    x = jax.random.normal(key, (2, 4, 16, 16), dtype=jnp.float32)

    # Fast path (the real LinearAct forward): no kernel launch, no copy.
    y_fast = linear_act(x)
    jax.block_until_ready(y_fast)
    assert y_fast.shape == x.shape and y_fast.dtype == x.dtype
    assert bool(jnp.all(y_fast == x))

    # Forced materialized copy: single HBM->HBM DMA (lane-dense 2-D flatten).
    y = linear_act(x, force_kernel=True)
    jax.block_until_ready(y)
    assert y.shape == x.shape and y.dtype == x.dtype
    assert bool(jnp.all(y == x))

    # Non-multiple-of-128 element count: 1-D flat DMA copy, no masked stores.
    key, sub = jax.random.split(key)
    x_odd = jax.random.normal(sub, (3, 5, 7), dtype=jnp.float32)
    y_odd = linear_act(x_odd, force_kernel=True)
    jax.block_until_ready(y_odd)
    assert y_odd.shape == x_odd.shape and y_odd.dtype == x_odd.dtype
    assert bool(jnp.all(y_odd == x_odd))

    # ~2 MiB tensor: exercises the multi-chunk (overlapping DMA) path.
    key, sub = jax.random.split(key)
    x_big = jax.random.normal(sub, (4, 32, 64, 64), dtype=jnp.float32)
    y_big = linear_act(x_big, force_kernel=True)
    jax.block_until_ready(y_big)
    assert bool(jnp.all(y_big == x_big))

    print("KERNEL_OK")
</pallas_src>

<mosaic_0001>
module attributes {stable_mosaic.version = 11 : i64} {
  func.func @kernel(%arg0: memref<1x2048xf32, #tpu.memory_space<any>>, %arg1: memref<1x2048xf32, #tpu.memory_space<any>>, %arg2: memref<1x!tpu.dma_semaphore, #tpu.memory_space<semaphore_mem>>) attributes {dimension_semantics = [], scalar_prefetch = 0 : i64, scratch_operands = 1 : i64, tpu.core_type = #tpu.core_type<tc>} {
    %c0_i32 = arith.constant 0 : i32
    %c0_i32_0 = arith.constant 0 : i32
    %c0_i32_1 = arith.constant 0 : i32
    %0 = tpu.memref_slice %arg0[%c0_i32_0, %c0_i32_1] : memref<1x2048xf32, #tpu.memory_space<any>> -> memref<1x2048xf32, #tpu.memory_space<any>>
    %c0_i32_2 = arith.constant 0 : i32
    %c0_i32_3 = arith.constant 0 : i32
    %1 = tpu.memref_slice %arg1[%c0_i32_2, %c0_i32_3] : memref<1x2048xf32, #tpu.memory_space<any>> -> memref<1x2048xf32, #tpu.memory_space<any>>
    %2 = tpu.memref_slice %arg2[%c0_i32] : memref<1x!tpu.dma_semaphore, #tpu.memory_space<semaphore_mem>> -> memref<1x!tpu.dma_semaphore, #tpu.memory_space<semaphore_mem>>
    %3 = tpu.memref_squeeze %2 : memref<1x!tpu.dma_semaphore, #tpu.memory_space<semaphore_mem>> -> memref<!tpu.dma_semaphore, #tpu.memory_space<semaphore_mem>>
    tpu.enqueue_dma source(%0 : memref<1x2048xf32, #tpu.memory_space<any>>) target(%1 : memref<1x2048xf32, #tpu.memory_space<any>>) target_semaphore(%3 : memref<!tpu.dma_semaphore, #tpu.memory_space<semaphore_mem>>)
    %c0_i32_4 = arith.constant 0 : i32
    %c0_i32_5 = arith.constant 0 : i32
    %c0_i32_6 = arith.constant 0 : i32
    %4 = tpu.memref_slice %arg0[%c0_i32_5, %c0_i32_6] : memref<1x2048xf32, #tpu.memory_space<any>> -> memref<1x2048xf32, #tpu.memory_space<any>>
    %c0_i32_7 = arith.constant 0 : i32
    %c0_i32_8 = arith.constant 0 : i32
    %5 = tpu.memref_slice %arg1[%c0_i32_7, %c0_i32_8] : memref<1x2048xf32, #tpu.memory_space<any>> -> memref<1x2048xf32, #tpu.memory_space<any>>
    %6 = tpu.memref_slice %arg2[%c0_i32_4] : memref<1x!tpu.dma_semaphore, #tpu.memory_space<semaphore_mem>> -> memref<1x!tpu.dma_semaphore, #tpu.memory_space<semaphore_mem>>
    %7 = tpu.memref_squeeze %6 : memref<1x!tpu.dma_semaphore, #tpu.memory_space<semaphore_mem>> -> memref<!tpu.dma_semaphore, #tpu.memory_space<semaphore_mem>>
    tpu.wait_dma2 semaphore(%7 : memref<!tpu.dma_semaphore, #tpu.memory_space<semaphore_mem>>) src(%4 : memref<1x2048xf32, #tpu.memory_space<any>>) dst(%5 : memref<1x2048xf32, #tpu.memory_space<any>>)
    return
  }
}

</mosaic_0001>

<llo_original>
// kernel: tpu_custom_call.1
$region0: #{tpu_custom_call.1}
  #allocation0 [shape = 'u32[]', space=smem, size = 0x4, offset = 0x4, fixed_abs, tag = 'smem constant byte address 0x4 - core index']
  #allocation1 [shape = 'u32[144,128]{1,0:T(1,128)}', space=vmem, size = 0x12000, scoped, tag = 'internal scratch']
  #allocation2 [shape = 's32[1]{0}', space=sflag, size = 0x4, scoped, tag = 'scratch operand']
  #allocation3 [shape = 's32[]', space=sflag, size = 0x4, offset = 0, fixed_abs, tag = 'sflag constant byte address 0x0 - dummy sync flag']
  #allocation4 [shape = 'u32[0]{0}', space=smem, size = 0, offset = 0, fixed_abs, tag = 'smem constant byte address 0x0 - null']
  %s0 = inlined_call_operand.hbm [shape: f32[1,2048], index: 0, kind: input, shape index: {}]
  %s1 = inlined_call_operand.hbm [shape: f32[1,2048], index: 1, kind: output, shape index: {}]
  %s2 = sld [smem:[#allocation0]]
  $region2: #{tpu_custom_call.1} parent=0
    _
  %s4 = ssub.s32 1, %s2
  %s5 = scalar_select 0, %s4, %s2
  %s7 = sshll.u32 1, 14
  %s8 = sxor.u32 4294967295, %s7
  %12 = dma.general %s0, 256, %s1, [#allocation2], 131072, [#allocation4], 0, 0
  %s13 = smul.u32 1, 16
  %s14 = sshll.u32 %s13, 4
  %15 = dma.done [#allocation2], %s14
  %16 = vsyncmov [#allocation2]
  %s17 = vpop.sfrf %16
  %p18 = scmp.eq.s32.totalorder %s17, 0
  %p19 = pneg %p18
  %21 = shalt.err (%p19)

</llo_original>
